<compile_context>
chip_gen: v5e
topology: v5e:2x2
jax: 0.10.0
libtpu: 0.0.40
codegen_flags: <defaults>
</compile_context>

<pallas_src>
import functools

import jax
import jax.numpy as jnp
from jax import lax
from jax.experimental import pallas as pl
from jax.experimental.pallas import tpu as pltpu


# ----------------------------------------------------------------------------
# Kernel 1: 1x1 conv (matmul over channels) + folded BatchNorm + ReLU, M-tiled
# ----------------------------------------------------------------------------
def _conv1x1_bn_relu_kernel(x_ref, w_ref, scale_ref, bias_ref, o_ref,
                            *, compute_dtype):
    x = x_ref[...].astype(compute_dtype)
    w = w_ref[...].astype(compute_dtype)
    y = jnp.dot(x, w, preferred_element_type=jnp.float32)
    y = y * scale_ref[...] + bias_ref[...]          # BN fold + ReLU in f32
    o_ref[...] = jnp.maximum(y, 0.0).astype(o_ref.dtype)


def conv1x1_bn_relu(x_flat, w, scale, bias, *, tile_m=256,
                    compute_dtype=jnp.float32):
    M, cin = x_flat.shape
    cout = w.shape[1]
    tm = min(tile_m, M)                              # tm mult-of-8 or == M
    return pl.pallas_call(
        functools.partial(_conv1x1_bn_relu_kernel, compute_dtype=compute_dtype),
        out_shape=jax.ShapeDtypeStruct((M, cout), x_flat.dtype),
        grid=(pl.cdiv(M, tm),),
        in_specs=[
            pl.BlockSpec((tm, cin), lambda i: (i, 0)),     # streamed rows
            pl.BlockSpec((cin, cout), lambda i: (0, 0)),   # resident weights
            pl.BlockSpec((1, cout), lambda i: (0, 0)),
            pl.BlockSpec((1, cout), lambda i: (0, 0)),
        ],
        out_specs=pl.BlockSpec((tm, cout), lambda i: (i, 0)),
        compiler_params=pltpu.CompilerParams(
            dimension_semantics=("parallel",)),
    )(x_flat, w, scale, bias)


# ----------------------------------------------------------------------------
# Kernel 2: cascaded 5x5 maxpools (SPPF equivalence: 5, 5∘5=9, 5∘5∘5=13)
# One pallas_call produces all three pooled branches from a single -inf-padded
# input (pad = 6 = 13//2), tiled over (batch, channel-block).
# ----------------------------------------------------------------------------
def _pool5_valid(v, h, w):
    """Sliding 5-window max (VALID) along H then W: (1,h,w,C)->(1,h-4,w-4,C)."""
    t = v[:, 0:h - 4]
    for d in range(1, 5):                      # H axis: cheap outer-dim slices
        t = jnp.maximum(t, v[:, d:d + h - 4])
    o = t[:, :, 0:w - 4]
    for d in range(1, 5):                      # W axis (sublane) slices
        o = jnp.maximum(o, t[:, :, d:d + w - 4])
    return o


def _spp_cascade_pool_kernel(xp_ref, p5_ref, p9_ref, p13_ref, *, H, W):
    xp = xp_ref[...]                            # (1, H+12, W+12, tc), pad=-inf
    t5 = _pool5_valid(xp, H + 12, W + 12)       # (1, H+8, W+8, tc)
    t9 = _pool5_valid(t5, H + 8, W + 8)         # (1, H+4, W+4, tc)
    t13 = _pool5_valid(t9, H + 4, W + 4)        # (1, H,   W,   tc)
    p5_ref[...] = t5[:, 4:4 + H, 4:4 + W]
    p9_ref[...] = t9[:, 2:2 + H, 2:2 + W]
    p13_ref[...] = t13


def spp_cascade_pool(y1_nhwc):
    N, H, W, C = y1_nhwc.shape
    pad = 6                                     # largest effective radius (13//2)
    xp = jnp.pad(y1_nhwc, ((0, 0), (pad, pad), (pad, pad), (0, 0)),
                 constant_values=-jnp.inf)
    Hp, Wp = H + 2 * pad, W + 2 * pad
    tc = C if C <= 128 else 128                 # lane-dense channel tiles
    out_shape = jax.ShapeDtypeStruct((N, H, W, C), y1_nhwc.dtype)
    out_spec = pl.BlockSpec((1, H, W, tc), lambda n, c: (n, 0, 0, c))
    # TODO(synk): at large H/W additionally tile H into row strips with a halo
    # (needs pl.Element / manual DMA for overlapping windows).
    return pl.pallas_call(
        functools.partial(_spp_cascade_pool_kernel, H=H, W=W),
        out_shape=(out_shape, out_shape, out_shape),
        grid=(N, pl.cdiv(C, tc)),
        in_specs=[pl.BlockSpec((1, Hp, Wp, tc), lambda n, c: (n, 0, 0, c))],
        out_specs=(out_spec, out_spec, out_spec),
        compiler_params=pltpu.CompilerParams(
            dimension_semantics=("parallel", "parallel")),
    )(xp)


# ----------------------------------------------------------------------------
# Kernel 3: fused second 1x1 conv — no HBM concat.  y2 = relu(BN(Σ_b f_b @ W2_b))
# ----------------------------------------------------------------------------
def _spp_conv2_kernel(y1_ref, p5_ref, p9_ref, p13_ref, w_ref, scale_ref,
                      bias_ref, o_ref, *, compute_dtype):
    w = w_ref[...].astype(compute_dtype)                      # (4, c_, c2)
    acc = jnp.dot(y1_ref[...].astype(compute_dtype), w[0],
                  preferred_element_type=jnp.float32)
    acc = acc + jnp.dot(p5_ref[...].astype(compute_dtype), w[1],
                        preferred_element_type=jnp.float32)
    acc = acc + jnp.dot(p9_ref[...].astype(compute_dtype), w[2],
                        preferred_element_type=jnp.float32)
    acc = acc + jnp.dot(p13_ref[...].astype(compute_dtype), w[3],
                        preferred_element_type=jnp.float32)
    acc = acc * scale_ref[...] + bias_ref[...]
    o_ref[...] = jnp.maximum(acc, 0.0).astype(o_ref.dtype)


def spp_conv2_bn_relu(y1_flat, p5_flat, p9_flat, p13_flat, w2, scale, bias,
                      *, tile_m=256, compute_dtype=jnp.float32):
    M, c_ = y1_flat.shape
    _, _, c2 = w2.shape                         # (4, c_, c2)
    tm = min(tile_m, M)
    feat_spec = pl.BlockSpec((tm, c_), lambda i: (i, 0))
    return pl.pallas_call(
        functools.partial(_spp_conv2_kernel, compute_dtype=compute_dtype),
        out_shape=jax.ShapeDtypeStruct((M, c2), y1_flat.dtype),
        grid=(pl.cdiv(M, tm),),
        in_specs=[feat_spec, feat_spec, feat_spec, feat_spec,
                  pl.BlockSpec((4, c_, c2), lambda i: (0, 0, 0)),
                  pl.BlockSpec((1, c2), lambda i: (0, 0)),
                  pl.BlockSpec((1, c2), lambda i: (0, 0))],
        out_specs=pl.BlockSpec((tm, c2), lambda i: (i, 0)),
        compiler_params=pltpu.CompilerParams(
            dimension_semantics=("parallel",)),
    )(y1_flat, p5_flat, p9_flat, p13_flat, w2, scale, bias)


# ----------------------------------------------------------------------------
# SPP module: parameter init + forward
# ----------------------------------------------------------------------------
def _fold_bn(gamma, beta, mean, var, eps=1e-5):
    scale = gamma / jnp.sqrt(var + eps)
    bias = beta - mean * scale
    return scale.reshape(1, -1), bias.reshape(1, -1)


def init_spp_params(key, c1, c2, k=(5, 9, 13)):
    c_ = c1 // 2
    nb = len(k) + 1
    ks = jax.random.split(key, 8)
    # conv weights: torch is (cout, cin, 1, 1); stored here as (cin, cout).
    # W2 kept as (nb, c_, c2) row-blocks so the fused conv2 never needs the concat.
    w1 = 0.1 * jax.random.normal(ks[0], (c1, c_), jnp.float32)
    w2 = 0.1 * jax.random.normal(ks[1], (nb, c_, c2), jnp.float32)
    g1 = 1.0 + 0.1 * jax.random.normal(ks[2], (c_,), jnp.float32)
    b1 = 0.1 * jax.random.normal(ks[3], (c_,), jnp.float32)
    m1 = 0.05 * jax.random.normal(ks[4], (c_,), jnp.float32)
    v1 = 1.0 + 0.1 * jax.random.uniform(ks[5], (c_,), jnp.float32)
    g2 = 1.0 + 0.1 * jax.random.normal(ks[6], (c2,), jnp.float32)
    b2 = 0.1 * jax.random.normal(ks[7], (c2,), jnp.float32)
    m2 = jnp.zeros((c2,), jnp.float32)
    v2 = jnp.ones((c2,), jnp.float32)
    s1, bb1 = _fold_bn(g1, b1, m1, v1)
    s2, bb2 = _fold_bn(g2, b2, m2, v2)
    return {"w1": w1, "s1": s1, "b1": bb1, "w2": w2, "s2": s2, "b2": bb2}


def spp_forward(x_nchw, params, *, compute_dtype=jnp.float32):
    # Use compute_dtype=jnp.bfloat16 on v6e/v7x for MXU throughput (epilogue
    # stays f32); default f32 matches the PyTorch module numerically.
    N, C1, H, W = x_nchw.shape
    # TODO(synk): keep NHWC end-to-end if the surrounding model allows; these
    # transposes exist only to honor the PyTorch NCHW interface.
    x = jnp.transpose(x_nchw, (0, 2, 3, 1))                    # NHWC
    y1 = conv1x1_bn_relu(x.reshape(N * H * W, C1), params["w1"],
                         params["s1"], params["b1"],
                         compute_dtype=compute_dtype)
    c_ = y1.shape[1]
    y1_nhwc = y1.reshape(N, H, W, c_)
    # SPPF-equivalent cascade: pool5, pool9 = pool5(pool5), pool13 = pool5(pool9)
    p5, p9, p13 = spp_cascade_pool(y1_nhwc)
    M = N * H * W
    y2 = spp_conv2_bn_relu(y1, p5.reshape(M, c_), p9.reshape(M, c_),
                           p13.reshape(M, c_), params["w2"], params["s2"],
                           params["b2"], compute_dtype=compute_dtype)
    c2 = y2.shape[1]
    return jnp.transpose(y2.reshape(N, H, W, c2), (0, 3, 1, 2))  # NCHW


# ----------------------------------------------------------------------------
# Pure-JAX reference (for correctness check only)
# ----------------------------------------------------------------------------
def spp_reference(x_nchw, params, k=(5, 9, 13)):
    N, C1, H, W = x_nchw.shape
    x = jnp.transpose(x_nchw, (0, 2, 3, 1))
    y1 = jnp.maximum(x @ params["w1"] * params["s1"][0] + params["b1"][0], 0.0)
    feats = [y1]
    for kk in k:
        p = kk // 2
        feats.append(lax.reduce_window(
            y1, -jnp.inf, lax.max,
            window_dimensions=(1, kk, kk, 1), window_strides=(1, 1, 1, 1),
            padding=((0, 0), (p, p), (p, p), (0, 0))))
    cat = jnp.concatenate(feats, axis=-1)
    w2_flat = params["w2"].reshape(-1, params["w2"].shape[-1])
    y2 = jnp.maximum(cat @ w2_flat * params["s2"][0] + params["b2"][0], 0.0)
    return jnp.transpose(y2, (0, 3, 1, 2))


if __name__ == "__main__":
    N, C1, H, W = 2, 4, 16, 16
    C2 = 8
    key = jax.random.PRNGKey(0)
    kx, kp = jax.random.split(key)
    x = jax.random.normal(kx, (N, C1, H, W), jnp.float32)
    params = init_spp_params(kp, C1, C2)

    out = jax.block_until_ready(spp_forward(x, params))
    ref = jax.block_until_ready(spp_reference(x, params))

    assert out.shape == (N, C2, H, W), out.shape
    assert jnp.allclose(out, ref, atol=1e-5, rtol=1e-5), float(
        jnp.max(jnp.abs(out - ref)))
    print("KERNEL_OK")
</pallas_src>

<mosaic_0001>
module attributes {stable_mosaic.version = 11 : i64} {
  func.func @_conv1x1_bn_relu_kernel(%arg0: i32, %arg1: memref<256x4xf32, #tpu.memory_space<vmem>>, %arg2: memref<4x2xf32, #tpu.memory_space<vmem>>, %arg3: memref<1x2xf32, #tpu.memory_space<vmem>>, %arg4: memref<1x2xf32, #tpu.memory_space<vmem>>, %arg5: memref<256x2xf32, #tpu.memory_space<vmem>>) attributes {dimension_semantics = [#tpu.dimension_semantics<parallel>], iteration_bounds = array<i64: 2>, scalar_prefetch = 0 : i64, scratch_operands = 0 : i64, tpu.core_type = #tpu.core_type<tc>, window_params = [{transform_indices = @transform_0, window_bounds = array<i64: 256, 4>}, {pipeline_mode = #tpu.pipeline_mode<synchronous>, transform_indices = @transform_1, window_bounds = array<i64: 4, 2>}, {pipeline_mode = #tpu.pipeline_mode<synchronous>, transform_indices = @transform_2, window_bounds = array<i64: 1, 2>}, {pipeline_mode = #tpu.pipeline_mode<synchronous>, transform_indices = @transform_3, window_bounds = array<i64: 1, 2>}, {transform_indices = @transform_4, window_bounds = array<i64: 256, 2>}]} {
    %c0 = arith.constant 0 : index
    %c0_0 = arith.constant 0 : index
    %0 = vector.load %arg1[%c0, %c0_0] : memref<256x4xf32, #tpu.memory_space<vmem>>, vector<256x4xf32>
    %c0_1 = arith.constant 0 : index
    %c0_2 = arith.constant 0 : index
    %1 = vector.load %arg2[%c0_1, %c0_2] : memref<4x2xf32, #tpu.memory_space<vmem>>, vector<4x2xf32>
    %cst = arith.constant dense<0.000000e+00> : vector<256x2xf32>
    %2 = tpu.matmul %0, %1, %cst {dimension_numbers = #tpu.dot_dimension_numbers<[1], [0], [0], [1], [0, 0, 1, 1], [], []>} : vector<256x4xf32>, vector<4x2xf32>, vector<256x2xf32> -> vector<256x2xf32>
    %c0_3 = arith.constant 0 : index
    %c0_4 = arith.constant 0 : index
    %3 = vector.load %arg3[%c0_3, %c0_4] : memref<1x2xf32, #tpu.memory_space<vmem>>, vector<1x2xf32>
    %4 = vector.broadcast %3 : vector<1x2xf32> to vector<256x2xf32>
    %5 = arith.mulf %2, %4 : vector<256x2xf32>
    %c0_5 = arith.constant 0 : index
    %c0_6 = arith.constant 0 : index
    %6 = vector.load %arg4[%c0_5, %c0_6] : memref<1x2xf32, #tpu.memory_space<vmem>>, vector<1x2xf32>
    %7 = vector.broadcast %6 : vector<1x2xf32> to vector<256x2xf32>
    %8 = arith.addf %5, %7 : vector<256x2xf32>
    %cst_7 = arith.constant 0.000000e+00 : f32
    %9 = vector.broadcast %cst_7 : f32 to vector<256x2xf32>
    %10 = arith.maximumf %8, %9 : vector<256x2xf32>
    %c0_8 = arith.constant 0 : index
    %c0_9 = arith.constant 0 : index
    %11 = vector.load %arg5[%c0_8, %c0_9] : memref<256x2xf32, #tpu.memory_space<vmem>>, vector<256x2xf32>
    tpu.vector_store %arg5[%c0_8, %c0_9], %10 {strides = array<i32>} : memref<256x2xf32, #tpu.memory_space<vmem>>, vector<256x2xf32>,
    return
  }
  func.func @transform_0(%arg0: i32) -> (i32, i32) {
    %c0_i32 = arith.constant 0 : i32
    %c0_i32_0 = arith.constant 0 : i32
    return %arg0, %c0_i32 : i32, i32
  }
  func.func @transform_1(%arg0: i32) -> (i32, i32) {
    %c0_i32 = arith.constant 0 : i32
    %c0_i32_0 = arith.constant 0 : i32
    %c0_i32_1 = arith.constant 0 : i32
    return %c0_i32, %c0_i32_0 : i32, i32
  }
  func.func @transform_2(%arg0: i32) -> (i32, i32) {
    %c0_i32 = arith.constant 0 : i32
    %c0_i32_0 = arith.constant 0 : i32
    %c0_i32_1 = arith.constant 0 : i32
    return %c0_i32, %c0_i32_0 : i32, i32
  }
  func.func @transform_3(%arg0: i32) -> (i32, i32) {
    %c0_i32 = arith.constant 0 : i32
    %c0_i32_0 = arith.constant 0 : i32
    %c0_i32_1 = arith.constant 0 : i32
    return %c0_i32, %c0_i32_0 : i32, i32
  }
  func.func @transform_4(%arg0: i32) -> (i32, i32) {
    %c0_i32 = arith.constant 0 : i32
    %c0_i32_0 = arith.constant 0 : i32
    return %arg0, %c0_i32 : i32, i32
  }
}

</mosaic_0001>

<llo_original>
// kernel: tpu_custom_call.1
$region0: #{tpu_custom_call.1}
  #allocation0 [shape = 'u32[]', space=smem, size = 0x4, offset = 0x4, fixed_abs, tag = 'smem constant byte address 0x4 - core index']
  #allocation1 [shape = 'u32[72,128]{1,0:T(1,128)}', space=vmem, size = 0x9000, scoped, tag = 'internal scratch']
  %s0 = inlined_call_operand.vmem [shape: f32[512,4], index: 0, kind: input, shape index: {}]
  %s1 = inlined_call_operand.vmem [shape: f32[4,2], index: 1, kind: input, shape index: {}]
  %s2 = inlined_call_operand.vmem [shape: f32[1,2], index: 2, kind: input, shape index: {}]
  %s3 = inlined_call_operand.vmem [shape: f32[1,2], index: 3, kind: input, shape index: {}]
  %s4 = inlined_call_operand.vmem [shape: f32[512,2], index: 4, kind: output, shape index: {}]
  %s5 = sld [smem:[#allocation0]]
  $region49: #{tpu_custom_call.1} parent=0
    _
  %s7 = ssub.s32 1, %s5
  %s8 = scalar_select 0, %s7, %s5
  loop: start=0, step=1, limit=4
  $region2: #{tpu_custom_call.1} parent=0 // loop_pre_header
    _
  $region3: #{tpu_custom_call.1} parent=0 // loop_header
    %s10 = sphi 0, %s14
    %p11 = scmp.ge.s32.totalorder %s10, 4
    %s20 = sphi 0, %s22
    %s23 = sphi 0, %s20
    %s24 = sphi 0, %s23
    %s40 = sphi 0, %s24
    %s44 = sphi 0, %s44
    %s46 = sphi 0, %s44
    %s47 = sphi 0, %s46
    %s61 = sphi 0, %s47
    %s65 = sphi 0, %s65
    %s67 = sphi 0, %s65
    %s68 = sphi 0, %s67
    %s82 = sphi 0, %s68
    %s86 = sphi 0, %s86
    %s88 = sphi 0, %s86
    %s89 = sphi 0, %s88
    %s103 = sphi 0, %s89
    %s109 = sphi 0, %s111
    %s112 = sphi 0, %s109
    %s113 = sphi 0, %s112
    %s129 = sphi 0, %s113
  $region4: #{tpu_custom_call.1} parent=0 // loop_header_branch
    %13 = sbr.rel (%p11) target = $region8
  $region5: #{tpu_custom_call.1} parent=0 // loop_body
    %s15 = ssub.s32 %s10, 1
    %s16 = ssub.s32 %s10, 2
    %s17 = sadd.s32 %s10, 1
    %s18 = ssub.s32 %s10, %s17
    %p19 = scmp.eq.s32.totalorder %s18, 0
    %s21 = sadd.s32 %s20, 1
    %s22 = scalar_select %p19, %s20, %s21
    %p25 = pneg %p19
    %p26 = scmp.eq.s32.totalorder %s10, 1
    %p27 = por %p25, %p26
    %p28 = scmp.ne.s32.totalorder %s20, %s23
    %p29 = scmp.eq.s32.totalorder %s10, 0
    %p30 = por %p28, %p29
    %p31 = scmp.ne.s32.totalorder %s20, %s23
    %p32 = scmp.eq.s32.totalorder %s15, 1
    %p33 = por %p31, %p32
    %p34 = scmp.ne.s32.totalorder %s23, %s24
    %p35 = scmp.eq.s32.totalorder %s15, 0
    %p36 = por %p34, %p35
    %p37 = scmp.ne.s32.totalorder %s23, %s24
    %p38 = scmp.eq.s32.totalorder %s16, 1
    %p39 = por %p37, %p38
    %p41 = scmp.ne.s32.totalorder %s24, %s40
    %p42 = scmp.eq.s32.totalorder %s16, 0
    %p43 = por %p41, %p42
    %s45 = sadd.s32 %s44, 1
    %p48 = scmp.eq.s32.totalorder %s10, 1
    %p49 = scmp.ne.s32.totalorder %s44, %s46
    %p50 = scmp.eq.s32.totalorder %s10, 0
    %p51 = por %p49, %p50
    %p52 = scmp.ne.s32.totalorder %s44, %s46
    %p53 = scmp.eq.s32.totalorder %s15, 1
    %p54 = por %p52, %p53
    %p55 = scmp.ne.s32.totalorder %s46, %s47
    %p56 = scmp.eq.s32.totalorder %s15, 0
    %p57 = por %p55, %p56
    %p58 = scmp.ne.s32.totalorder %s46, %s47
    %p59 = scmp.eq.s32.totalorder %s16, 1
    %p60 = por %p58, %p59
    %p62 = scmp.ne.s32.totalorder %s47, %s61
    %p63 = scmp.eq.s32.totalorder %s16, 0
    %p64 = por %p62, %p63
    %s66 = sadd.s32 %s65, 1
    %p69 = scmp.eq.s32.totalorder %s10, 1
    %p70 = scmp.ne.s32.totalorder %s65, %s67
    %p71 = scmp.eq.s32.totalorder %s10, 0
    %p72 = por %p70, %p71
    %p73 = scmp.ne.s32.totalorder %s65, %s67
    %p74 = scmp.eq.s32.totalorder %s15, 1
    %p75 = por %p73, %p74
    %p76 = scmp.ne.s32.totalorder %s67, %s68
    %p77 = scmp.eq.s32.totalorder %s15, 0
    %p78 = por %p76, %p77
    %p79 = scmp.ne.s32.totalorder %s67, %s68
    %p80 = scmp.eq.s32.totalorder %s16, 1
    %p81 = por %p79, %p80
    %p83 = scmp.ne.s32.totalorder %s68, %s82
    %p84 = scmp.eq.s32.totalorder %s16, 0
    %p85 = por %p83, %p84
    %s87 = sadd.s32 %s86, 1
    %p90 = scmp.eq.s32.totalorder %s10, 1
    %p91 = scmp.ne.s32.totalorder %s86, %s88
    %p92 = scmp.eq.s32.totalorder %s10, 0
    %p93 = por %p91, %p92
    %p94 = scmp.ne.s32.totalorder %s86, %s88
    %p95 = scmp.eq.s32.totalorder %s15, 1
    %p96 = por %p94, %p95
    %p97 = scmp.ne.s32.totalorder %s88, %s89
    %p98 = scmp.eq.s32.totalorder %s15, 0
    %p99 = por %p97, %p98
    %p100 = scmp.ne.s32.totalorder %s88, %s89
    %p101 = scmp.eq.s32.totalorder %s16, 1
    %p102 = por %p100, %p101
    %p104 = scmp.ne.s32.totalorder %s89, %s103
    %p105 = scmp.eq.s32.totalorder %s16, 0
    %p106 = por %p104, %p105
    %s107 = ssub.s32 %s10, %s17
    %p108 = scmp.eq.s32.totalorder %s107, 0
    %s110 = sadd.s32 %s109, 1
    %s111 = scalar_select %p108, %s109, %s110
    %p114 = pneg %p108
    %p115 = scmp.eq.s32.totalorder %s10, 1
    %p116 = por %p114, %p115
    %p117 = scmp.ne.s32.totalorder %s109, %s112
    %p118 = scmp.eq.s32.totalorder %s10, 0
    %p119 = por %p117, %p118
    %p120 = scmp.ne.s32.totalorder %s109, %s112
    %p121 = scmp.eq.s32.totalorder %s15, 1
    %p122 = por %p120, %p121
    %p123 = scmp.ne.s32.totalorder %s112, %s113
    %p124 = scmp.eq.s32.totalorder %s15, 0
    %p125 = por %p123, %p124
    %p126 = scmp.ne.s32.totalorder %s112, %s113
    %p127 = scmp.eq.s32.totalorder %s16, 1
    %p128 = por %p126, %p127
    %p130 = scmp.ne.s32.totalorder %s113, %s129
    %p131 = scmp.eq.s32.totalorder %s16, 0
    %p132 = por %p130, %p131
    %p133 = scmp.le.s32.totalorder 1, %s10
    %p134 = scmp.lt.s32.totalorder %s10, 3
    %p135 = pnand %p133, %p134
    %p136 = pneg %p135
    // Predicated region
    $region9: #{tpu_custom_call.1} parent=5 // pred_check
      _
    $region10: #{tpu_custom_call.1} parent=5 // pred_check_branch
      %138 = sbr.rel (%p135) target = $region12
    $region11: #{tpu_custom_call.1} parent=5 // pred_region
      %s139 = ssub.s32 %s10, 1
      // Predicated region
      $region13: #{tpu_custom_call.1} parent=11 // pred_check
        %p140 = pneg %p57
      $region14: #{tpu_custom_call.1} parent=11 // pred_check_branch
        %142 = sbr.rel (%p140) target = $region16
      $region15: #{tpu_custom_call.1} parent=11 // pred_region
        _
      $region16: #{tpu_custom_call.1} parent=11 // pred_fallthru
        _
      // Predicated region
      $region17: #{tpu_custom_call.1} parent=11 // pred_check
        %p143 = pneg %p78
      $region18: #{tpu_custom_call.1} parent=11 // pred_check_branch
        %145 = sbr.rel (%p143) target = $region20
      $region19: #{tpu_custom_call.1} parent=11 // pred_region
        _
      $region20: #{tpu_custom_call.1} parent=11 // pred_fallthru
        _
      // Predicated region
      $region21: #{tpu_custom_call.1} parent=11 // pred_check
        %p146 = pneg %p99
      $region22: #{tpu_custom_call.1} parent=11 // pred_check_branch
        %148 = sbr.rel (%p146) target = $region24
      $region23: #{tpu_custom_call.1} parent=11 // pred_region
        _
      $region24: #{tpu_custom_call.1} parent=11 // pred_fallthru
        _
    $region12: #{tpu_custom_call.1} parent=5 // pred_fallthru
      _
    %p149 = scmp.lt.s32.totalorder %s10, 2
    // Predicated region
    $region25: #{tpu_custom_call.1} parent=5 // pred_check
      %p150 = pneg %p149
    $region26: #{tpu_custom_call.1} parent=5 // pred_check_branch
      %152 = sbr.rel (%p150) target = $region28
    $region27: #{tpu_custom_call.1} parent=5 // pred_region
      // Predicated region
      $region29: #{tpu_custom_call.1} parent=27 // pred_check
        %p153 = pneg %p30
      $region30: #{tpu_custom_call.1} parent=27 // pred_check_branch
        %155 = sbr.rel (%p153) target = $region32
      $region31: #{tpu_custom_call.1} parent=27 // pred_region
        %s156 = smul.u32 32, %s10
        %p157 = scmp.lt.s32.totalorder %s156, 63
        %s158 = scalar_select %p157, %s156, 63
        %s159 = smul.addr %s158, 8
        %s160 = scalar_lea.vmem %s0, %s159
        %s161 = smul.u32 32, %s10
      $region32: #{tpu_custom_call.1} parent=27 // pred_fallthru
        _
    $region28: #{tpu_custom_call.1} parent=5 // pred_fallthru
      _
    %p162 = scmp.le.s32.totalorder 1, %s10
    %p163 = scmp.lt.s32.totalorder %s10, 3
    %p164 = pnand %p162, %p163
    %p165 = pneg %p164
    // Predicated region
    $region33: #{tpu_custom_call.1} parent=5 // pred_check
      _
    $region34: #{tpu_custom_call.1} parent=5 // pred_check_branch
      %167 = sbr.rel (%p164) target = $region36
    $region35: #{tpu_custom_call.1} parent=5 // pred_region
      %s168 = ssub.s32 %s10, 1
      %s169 = smul.u32 32, %s15
      %p170 = scmp.lt.s32.totalorder %s169, 63
      %s171 = scalar_select %p170, %s169, 63
      %s172 = smul.addr %s171, 8
      %s173 = scalar_lea.vmem %s0, %s172
      %p174 = pneg %p36
      %p175 = pneg %p33
      %p176 = pneg %p57
      %p177 = pneg %p54
      %p178 = pneg %p78
      %p179 = pneg %p75
      %p180 = pneg %p99
      %p181 = pneg %p96
      %p182 = pneg %p125
      %p183 = pneg %p122
      %s184 = smul.u32 32, %s15
      %p185 = scmp.lt.s32.totalorder %s184, 63
      %s186 = scalar_select %p185, %s184, 63
      %s187 = smul.addr %s186, 8
      %s188 = scalar_lea.vmem %s4, %s187
      %s189 = smul.u32 32, %s15
      %p190 = scmp.lt.s32.totalorder %s189, 63
      %s191 = scalar_select %p190, %s189, 63
      %s192 = smul.addr %s191, 8
      %s193 = scalar_lea.vmem %s0, %s192
      %s194 = smul.u32 32, %s15
      %s195 = smul.u32 32, %s15
      %p196 = scmp.lt.s32.totalorder %s195, 63
      %s197 = scalar_select %p196, %s195, 63
      %s198 = smul.addr %s197, 8
      %s199 = scalar_lea.vmem %s4, %s198
      %s200 = smul.u32 32, %s15
      %v201 = vld [vmem:[%s193] sm:$0xff]
      %v202 = vld [vmem:[%s193 + $0x8] sm:$0xff]
      %v203 = vld [vmem:[%s193 + $0x10] sm:$0xff]
      %v204 = vld [vmem:[%s193 + $0x18] sm:$0xff]
      %v205 = vld [vmem:[%s193 + $0x20] sm:$0xff]
      %v206 = vld [vmem:[%s193 + $0x28] sm:$0xff]
      %v207 = vld [vmem:[%s193 + $0x30] sm:$0xff]
      %v208 = vld [vmem:[%s193 + $0x38] sm:$0xff]
      %v209 = vld [vmem:[%s193 + $0x40] sm:$0xff]
      %v210 = vld [vmem:[%s193 + $0x48] sm:$0xff]
      %v211 = vld [vmem:[%s193 + $0x50] sm:$0xff]
      %v212 = vld [vmem:[%s193 + $0x58] sm:$0xff]
      %v213 = vld [vmem:[%s193 + $0x60] sm:$0xff]
      %v214 = vld [vmem:[%s193 + $0x68] sm:$0xff]
      %v215 = vld [vmem:[%s193 + $0x70] sm:$0xff]
      %v216 = vld [vmem:[%s193 + $0x78] sm:$0xff]
      %v217 = vld [vmem:[%s193 + $0x80] sm:$0xff]
      %v218 = vld [vmem:[%s193 + $0x88] sm:$0xff]
      %v219 = vld [vmem:[%s193 + $0x90] sm:$0xff]
      %v220 = vld [vmem:[%s193 + $0x98] sm:$0xff]
      %v221 = vld [vmem:[%s193 + $0xa0] sm:$0xff]
      %v222 = vld [vmem:[%s193 + $0xa8] sm:$0xff]
      %v223 = vld [vmem:[%s193 + $0xb0] sm:$0xff]
      %v224 = vld [vmem:[%s193 + $0xb8] sm:$0xff]
      %v225 = vld [vmem:[%s193 + $0xc0] sm:$0xff]
      %v226 = vld [vmem:[%s193 + $0xc8] sm:$0xff]
      %v227 = vld [vmem:[%s193 + $0xd0] sm:$0xff]
      %v228 = vld [vmem:[%s193 + $0xd8] sm:$0xff]
      %v229 = vld [vmem:[%s193 + $0xe0] sm:$0xff]
      %v230 = vld [vmem:[%s193 + $0xe8] sm:$0xff]
      %v231 = vld [vmem:[%s193 + $0xf0] sm:$0xff]
      %v232 = vld [vmem:[%s193 + $0xf8] sm:$0xff]
      %v233 = vld [vmem:[%s1] sm:$0xf]
      %vm234 = vcmask 31744
      %v236 = vsel %vm234, %v201, 0
      %v239 = vsel %vm234, %v202, 0
      %v242 = vsel %vm234, %v203, 0
      %v245 = vsel %vm234, %v204, 0
      %v248 = vsel %vm234, %v205, 0
      %v251 = vsel %vm234, %v206, 0
      %v254 = vsel %vm234, %v207, 0
      %v257 = vsel %vm234, %v208, 0
      %v260 = vsel %vm234, %v209, 0
      %v263 = vsel %vm234, %v210, 0
      %v266 = vsel %vm234, %v211, 0
      %v269 = vsel %vm234, %v212, 0
      %v272 = vsel %vm234, %v213, 0
      %v275 = vsel %vm234, %v214, 0
      %v278 = vsel %vm234, %v215, 0
      %v281 = vsel %vm234, %v216, 0
      %v284 = vsel %vm234, %v217, 0
      %v287 = vsel %vm234, %v218, 0
      %v290 = vsel %vm234, %v219, 0
      %v293 = vsel %vm234, %v220, 0
      %v296 = vsel %vm234, %v221, 0
      %v299 = vsel %vm234, %v222, 0
      %v302 = vsel %vm234, %v223, 0
      %v305 = vsel %vm234, %v224, 0
      %v308 = vsel %vm234, %v225, 0
      %v311 = vsel %vm234, %v226, 0
      %v314 = vsel %vm234, %v227, 0
      %v317 = vsel %vm234, %v228, 0
      %v320 = vsel %vm234, %v229, 0
      %v323 = vsel %vm234, %v230, 0
      %v326 = vsel %vm234, %v231, 0
      %v329 = vsel %vm234, %v232, 0
      %vm331 = vcmask 1043456
      %v333 = vsel %vm331, %v233, 0
      %335 = vmatpush.msra.mxu0 0.0
      %336 = vmatpush.msra.mxu0 0.0
      %337 = vmatpush.msra.mxu0 0.0
      %338 = vmatpush.msra.mxu0 0.0
      %339 = vmatpush.msra.mxu0 0.0
      %340 = vmatpush.msra.mxu0 0.0
      %341 = vmatpush.msra.mxu0 0.0
      %342 = vmatpush.msra.mxu0 0.0
      %343 = vmatpush.msra.mxu0 0.0
      %344 = vmatpush.msra.mxu0 0.0
      %345 = vmatpush.msra.mxu0 0.0
      %346 = vmatpush.msra.mxu0 0.0
      %347 = vmatpush.msra.mxu0 0.0
      %348 = vmatpush.msra.mxu0 0.0
      %349 = vmatpush.msra.mxu0 0.0
      %350 = vmatpush.msra.mxu0 %v333
      %351 = vmatmul.f32.gmra.mxu0 %v236
      %v352 = vpop.f32.mrf.mxu0
      %v353 = vadd.f32 0.0, %v352
      %354 = vmatmul.f32.gmra.mxu0 %v239
      %v355 = vpop.f32.mrf.mxu0
      %v356 = vadd.f32 0.0, %v355
      %357 = vmatmul.f32.gmra.mxu0 %v242
      %v358 = vpop.f32.mrf.mxu0
      %v359 = vadd.f32 0.0, %v358
      %360 = vmatmul.f32.gmra.mxu0 %v245
      %v361 = vpop.f32.mrf.mxu0
      %v362 = vadd.f32 0.0, %v361
      %363 = vmatmul.f32.gmra.mxu0 %v248
      %v364 = vpop.f32.mrf.mxu0
      %v365 = vadd.f32 0.0, %v364
      %366 = vmatmul.f32.gmra.mxu0 %v251
      %v367 = vpop.f32.mrf.mxu0
      %v368 = vadd.f32 0.0, %v367
      %369 = vmatmul.f32.gmra.mxu0 %v254
      %v370 = vpop.f32.mrf.mxu0
      %v371 = vadd.f32 0.0, %v370
      %372 = vmatmul.f32.gmra.mxu0 %v257
      %v373 = vpop.f32.mrf.mxu0
      %v374 = vadd.f32 0.0, %v373
      %375 = vmatmul.f32.gmra.mxu0 %v260
      %v376 = vpop.f32.mrf.mxu0
      %v377 = vadd.f32 0.0, %v376
      %378 = vmatmul.f32.gmra.mxu0 %v263
      %v379 = vpop.f32.mrf.mxu0
      %v380 = vadd.f32 0.0, %v379
      %381 = vmatmul.f32.gmra.mxu0 %v266
      %v382 = vpop.f32.mrf.mxu0
      %v383 = vadd.f32 0.0, %v382
      %384 = vmatmul.f32.gmra.mxu0 %v269
      %v385 = vpop.f32.mrf.mxu0
      %v386 = vadd.f32 0.0, %v385
      %387 = vmatmul.f32.gmra.mxu0 %v272
      %v388 = vpop.f32.mrf.mxu0
      %v389 = vadd.f32 0.0, %v388
      %390 = vmatmul.f32.gmra.mxu0 %v275
      %v391 = vpop.f32.mrf.mxu0
      %v392 = vadd.f32 0.0, %v391
      %393 = vmatmul.f32.gmra.mxu0 %v278
      %v394 = vpop.f32.mrf.mxu0
      %v395 = vadd.f32 0.0, %v394
      %396 = vmatmul.f32.gmra.mxu0 %v281
      %v397 = vpop.f32.mrf.mxu0
      %v398 = vadd.f32 0.0, %v397
      %399 = vmatmul.f32.gmra.mxu0 %v284
      %v400 = vpop.f32.mrf.mxu0
      %v401 = vadd.f32 0.0, %v400
      %402 = vmatmul.f32.gmra.mxu0 %v287
      %v403 = vpop.f32.mrf.mxu0
      %v404 = vadd.f32 0.0, %v403
      %405 = vmatmul.f32.gmra.mxu0 %v290
      %v406 = vpop.f32.mrf.mxu0
      %v407 = vadd.f32 0.0, %v406
      %408 = vmatmul.f32.gmra.mxu0 %v293
      %v409 = vpop.f32.mrf.mxu0
      %v410 = vadd.f32 0.0, %v409
      %411 = vmatmul.f32.gmra.mxu0 %v296
      %v412 = vpop.f32.mrf.mxu0
      %v413 = vadd.f32 0.0, %v412
      %414 = vmatmul.f32.gmra.mxu0 %v299
      %v415 = vpop.f32.mrf.mxu0
      %v416 = vadd.f32 0.0, %v415
      %417 = vmatmul.f32.gmra.mxu0 %v302
      %v418 = vpop.f32.mrf.mxu0
      %v419 = vadd.f32 0.0, %v418
      %420 = vmatmul.f32.gmra.mxu0 %v305
      %v421 = vpop.f32.mrf.mxu0
      %v422 = vadd.f32 0.0, %v421
      %423 = vmatmul.f32.gmra.mxu0 %v308
      %v424 = vpop.f32.mrf.mxu0
      %v425 = vadd.f32 0.0, %v424
      %426 = vmatmul.f32.gmra.mxu0 %v311
      %v427 = vpop.f32.mrf.mxu0
      %v428 = vadd.f32 0.0, %v427
      %429 = vmatmul.f32.gmra.mxu0 %v314
      %v430 = vpop.f32.mrf.mxu0
      %v431 = vadd.f32 0.0, %v430
      %432 = vmatmul.f32.gmra.mxu0 %v317
      %v433 = vpop.f32.mrf.mxu0
      %v434 = vadd.f32 0.0, %v433
      %435 = vmatmul.f32.gmra.mxu0 %v320
      %v436 = vpop.f32.mrf.mxu0
      %v437 = vadd.f32 0.0, %v436
      %438 = vmatmul.f32.gmra.mxu0 %v323
      %v439 = vpop.f32.mrf.mxu0
      %v440 = vadd.f32 0.0, %v439
      %441 = vmatmul.f32.gmra.mxu0 %v326
      %v442 = vpop.f32.mrf.mxu0
      %v443 = vadd.f32 0.0, %v442
      %444 = vmatmul.f32.gmra.mxu0 %v329
      %v445 = vpop.f32.mrf.mxu0
      %v446 = vadd.f32 0.0, %v445
      %447 = vdwg.mxu0
      %v448 = vld [vmem:[%s2] sm:$0x1]
      %v450 = vperm.slane %v448, 0
      %v452 = vmul.f32 %v353, %v450
      %v453 = vmul.f32 %v356, %v450
      %v454 = vmul.f32 %v359, %v450
      %v455 = vmul.f32 %v362, %v450
      %v456 = vmul.f32 %v365, %v450
      %v457 = vmul.f32 %v368, %v450
      %v458 = vmul.f32 %v371, %v450
      %v459 = vmul.f32 %v374, %v450
      %v460 = vmul.f32 %v377, %v450
      %v461 = vmul.f32 %v380, %v450
      %v462 = vmul.f32 %v383, %v450
      %v463 = vmul.f32 %v386, %v450
      %v464 = vmul.f32 %v389, %v450
      %v465 = vmul.f32 %v392, %v450
      %v466 = vmul.f32 %v395, %v450
      %v467 = vmul.f32 %v398, %v450
      %v468 = vmul.f32 %v401, %v450
      %v469 = vmul.f32 %v404, %v450
      %v470 = vmul.f32 %v407, %v450
      %v471 = vmul.f32 %v410, %v450
      %v472 = vmul.f32 %v413, %v450
      %v473 = vmul.f32 %v416, %v450
      %v474 = vmul.f32 %v419, %v450
      %v475 = vmul.f32 %v422, %v450
      %v476 = vmul.f32 %v425, %v450
      %v477 = vmul.f32 %v428, %v450
      %v478 = vmul.f32 %v431, %v450
      %v479 = vmul.f32 %v434, %v450
      %v480 = vmul.f32 %v437, %v450
      %v481 = vmul.f32 %v440, %v450
      %v482 = vmul.f32 %v443, %v450
      %v483 = vmul.f32 %v446, %v450
      %v484 = vld [vmem:[%s3] sm:$0x1]
      %v486 = vperm.slane %v484, 0
      %v488 = vadd.f32 %v452, %v486
      %v489 = vadd.f32 %v453, %v486
      %v490 = vadd.f32 %v454, %v486
      %v491 = vadd.f32 %v455, %v486
      %v492 = vadd.f32 %v456, %v486
      %v493 = vadd.f32 %v457, %v486
      %v494 = vadd.f32 %v458, %v486
      %v495 = vadd.f32 %v459, %v486
      %v496 = vadd.f32 %v460, %v486
      %v497 = vadd.f32 %v461, %v486
      %v498 = vadd.f32 %v462, %v486
      %v499 = vadd.f32 %v463, %v486
      %v500 = vadd.f32 %v464, %v486
      %v501 = vadd.f32 %v465, %v486
      %v502 = vadd.f32 %v466, %v486
      %v503 = vadd.f32 %v467, %v486
      %v504 = vadd.f32 %v468, %v486
      %v505 = vadd.f32 %v469, %v486
      %v506 = vadd.f32 %v470, %v486
      %v507 = vadd.f32 %v471, %v486
      %v508 = vadd.f32 %v472, %v486
      %v509 = vadd.f32 %v473, %v486
      %v510 = vadd.f32 %v474, %v486
      %v511 = vadd.f32 %v475, %v486
      %v512 = vadd.f32 %v476, %v486
      %v513 = vadd.f32 %v477, %v486
      %v514 = vadd.f32 %v478, %v486
      %v515 = vadd.f32 %v479, %v486
      %v516 = vadd.f32 %v480, %v486
      %v517 = vadd.f32 %v481, %v486
      %v518 = vadd.f32 %v482, %v486
      %v519 = vadd.f32 %v483, %v486
      %v520 = vmax.f32 %v488, 0.0
      %v521 = vmax.f32 %v489, 0.0
      %v522 = vmax.f32 %v490, 0.0
      %v523 = vmax.f32 %v491, 0.0
      %v524 = vmax.f32 %v492, 0.0
      %v525 = vmax.f32 %v493, 0.0
      %v526 = vmax.f32 %v494, 0.0
      %v527 = vmax.f32 %v495, 0.0
      %v528 = vmax.f32 %v496, 0.0
      %v529 = vmax.f32 %v497, 0.0
      %v530 = vmax.f32 %v498, 0.0
      %v531 = vmax.f32 %v499, 0.0
      %v532 = vmax.f32 %v500, 0.0
      %v533 = vmax.f32 %v501, 0.0
      %v534 = vmax.f32 %v502, 0.0
      %v535 = vmax.f32 %v503, 0.0
      %v536 = vmax.f32 %v504, 0.0
      %v537 = vmax.f32 %v505, 0.0
      %v538 = vmax.f32 %v506, 0.0
      %v539 = vmax.f32 %v507, 0.0
      %v540 = vmax.f32 %v508, 0.0
      %v541 = vmax.f32 %v509, 0.0
      %v542 = vmax.f32 %v510, 0.0
      %v543 = vmax.f32 %v511, 0.0
      %v544 = vmax.f32 %v512, 0.0
      %v545 = vmax.f32 %v513, 0.0
      %v546 = vmax.f32 %v514, 0.0
      %v547 = vmax.f32 %v515, 0.0
      %v548 = vmax.f32 %v516, 0.0
      %v549 = vmax.f32 %v517, 0.0
      %v550 = vmax.f32 %v518, 0.0
      %v551 = vmax.f32 %v519, 0.0
      %vm552 = vcmask 15360
      %553 = vst.msk [vmem:[%s199] sm:$0xff] %vm552, %v520
      %554 = vst.msk [vmem:[%s199 + $0x8] sm:$0xff] %vm552, %v521
      %555 = vst.msk [vmem:[%s199 + $0x10] sm:$0xff] %vm552, %v522
      %556 = vst.msk [vmem:[%s199 + $0x18] sm:$0xff] %vm552, %v523
      %557 = vst.msk [vmem:[%s199 + $0x20] sm:$0xff] %vm552, %v524
      %558 = vst.msk [vmem:[%s199 + $0x28] sm:$0xff] %vm552, %v525
      %559 = vst.msk [vmem:[%s199 + $0x30] sm:$0xff] %vm552, %v526
      %560 = vst.msk [vmem:[%s199 + $0x38] sm:$0xff] %vm552, %v527
      %561 = vst.msk [vmem:[%s199 + $0x40] sm:$0xff] %vm552, %v528
      %562 = vst.msk [vmem:[%s199 + $0x48] sm:$0xff] %vm552, %v529
      %563 = vst.msk [vmem:[%s199 + $0x50] sm:$0xff] %vm552, %v530
      %564 = vst.msk [vmem:[%s199 + $0x58] sm:$0xff] %vm552, %v531
      %565 = vst.msk [vmem:[%s199 + $0x60] sm:$0xff] %vm552, %v532
      %566 = vst.msk [vmem:[%s199 + $0x68] sm:$0xff] %vm552, %v533
      %567 = vst.msk [vmem:[%s199 + $0x70] sm:$0xff] %vm552, %v534
      %568 = vst.msk [vmem:[%s199 + $0x78] sm:$0xff] %vm552, %v535
      %569 = vst.msk [vmem:[%s199 + $0x80] sm:$0xff] %vm552, %v536
      %570 = vst.msk [vmem:[%s199 + $0x88] sm:$0xff] %vm552, %v537
      %571 = vst.msk [vmem:[%s199 + $0x90] sm:$0xff] %vm552, %v538
      %572 = vst.msk [vmem:[%s199 + $0x98] sm:$0xff] %vm552, %v539
      %573 = vst.msk [vmem:[%s199 + $0xa0] sm:$0xff] %vm552, %v540
      %574 = vst.msk [vmem:[%s199 + $0xa8] sm:$0xff] %vm552, %v541
      %575 = vst.msk [vmem:[%s199 + $0xb0] sm:$0xff] %vm552, %v542
      %576 = vst.msk [vmem:[%s199 + $0xb8] sm:$0xff] %vm552, %v543
      %577 = vst.msk [vmem:[%s199 + $0xc0] sm:$0xff] %vm552, %v544
      %578 = vst.msk [vmem:[%s199 + $0xc8] sm:$0xff] %vm552, %v545
      %579 = vst.msk [vmem:[%s199 + $0xd0] sm:$0xff] %vm552, %v546
      %580 = vst.msk [vmem:[%s199 + $0xd8] sm:$0xff] %vm552, %v547
      %581 = vst.msk [vmem:[%s199 + $0xe0] sm:$0xff] %vm552, %v548
      %582 = vst.msk [vmem:[%s199 + $0xe8] sm:$0xff] %vm552, %v549
      %583 = vst.msk [vmem:[%s199 + $0xf0] sm:$0xff] %vm552, %v550
      %584 = vst.msk [vmem:[%s199 + $0xf8] sm:$0xff] %vm552, %v551
      %s585 = smul.u32 32, %s15
      %p586 = scmp.lt.s32.totalorder %s585, 63
      %s587 = scalar_select %p586, %s585, 63
      %s588 = smul.addr %s587, 8
      %s589 = scalar_lea.vmem %s4, %s588
      // Predicated region
      $region37: #{tpu_custom_call.1} parent=35 // pred_check
        %p590 = pneg %p122
      $region38: #{tpu_custom_call.1} parent=35 // pred_check_branch
        %592 = sbr.rel (%p590) target = $region40
      $region39: #{tpu_custom_call.1} parent=35 // pred_region
        %s593 = smul.u32 32, %s15
      $region40: #{tpu_custom_call.1} parent=35 // pred_fallthru
        _
    $region36: #{tpu_custom_call.1} parent=5 // pred_fallthru
      _
    %p594 = scmp.le.s32.totalorder 2, %s10
    // Predicated region
    $region41: #{tpu_custom_call.1} parent=5 // pred_check
      %p595 = pneg %p594
    $region42: #{tpu_custom_call.1} parent=5 // pred_check_branch
      %597 = sbr.rel (%p595) target = $region44
    $region43: #{tpu_custom_call.1} parent=5 // pred_region
      %s598 = ssub.s32 %s10, 2
      // Predicated region
      $region45: #{tpu_custom_call.1} parent=43 // pred_check
        %p599 = pneg %p128
      $region46: #{tpu_custom_call.1} parent=43 // pred_check_branch
        %601 = sbr.rel (%p599) target = $region48
      $region47: #{tpu_custom_call.1} parent=43 // pred_region
        %s602 = smul.u32 32, %s16
        %p603 = scmp.lt.s32.totalorder %s602, 63
        %s604 = scalar_select %p603, %s602, 63
        %s605 = smul.addr %s604, 8
        %s606 = scalar_lea.vmem %s4, %s605
      $region48: #{tpu_custom_call.1} parent=43 // pred_fallthru
        _
    $region44: #{tpu_custom_call.1} parent=5 // pred_fallthru
      _
  $region6: #{tpu_custom_call.1} parent=0 // loop_footer
    %s14 = sadd.s32 1, %s10
  $region7: #{tpu_custom_call.1} parent=0 // loop_footer_branch
    %9 = sbr.rel target = $region3
  $region8: #{tpu_custom_call.1} parent=0 // loop_exit
    _

</llo_original>
